<compile_context>
chip_gen: v5e
topology: v5e:2x2
jax: 0.10.0
libtpu: 0.0.40
codegen_flags: <defaults>
</compile_context>

<pallas_src>
import jax
import jax.numpy as jnp
from jax.experimental import pallas as pl
from jax.experimental.pallas import tpu as pltpu

NEG_SLOPE = 0.01  # F.leaky_relu default


def _leaky_relu(v):
    return jnp.where(v > 0, v, NEG_SLOPE * v)


def _round_up(n, m):
    return ((n + m - 1) // m) * m


def edosnet_kernel(x_ref, w1_ref, w2_ref, w23_ref, woT_ref, bo_ref,
                   emb_ref, sT_ref):
    """One fused MLP tile.

    x_ref   : (TB, F)      input tile                        [compute dtype]
    w1_ref  : (F, H)       hidden_layer                      [compute dtype]
    w2_ref  : (H, E)       emb_layer                         [compute dtype]
    w23_ref : (H, C*H2)    emb_layer @ hidden_layer2(+_dup)  [compute dtype]
    woT_ref : (C, C*H2)    block-diag out_layer, transposed  [compute dtype]
    bo_ref  : (1,) SMEM    out_layer bias (f32 scalar)
    emb_ref : (TB, E)      embedding output (f32)
    sT_ref  : (C, TB)      tanh scores, lane-dense (f32); row 0 = s, row 1 = s2
    """
    cdt = w1_ref.dtype

    # hidden_layer + leaky_relu (activation math in f32).
    h = jnp.dot(x_ref[...], w1_ref[...], preferred_element_type=jnp.float32)
    h = _leaky_relu(h)                                       # (TB, H) f32
    h_mm = h.astype(cdt)

    # emb_layer output (no activation in the reference module).
    emb_ref[...] = jnp.dot(h_mm, w2_ref[...],
                           preferred_element_type=jnp.float32)

    # Fused score branch(es): (h @ w2) @ w3[_dup] == h @ (w2 @ w3[_dup]).
    branch = jnp.dot(h_mm, w23_ref[...],
                     preferred_element_type=jnp.float32)
    branch = _leaky_relu(branch)                             # (TB, C*H2) f32

    # out_layer + tanh, emitted transposed as (C, TB) so the store is
    # lane-dense (NT matmul: contract the C*H2 axis of both operands).
    s_t = jax.lax.dot_general(
        woT_ref[...], branch.astype(cdt),
        dimension_numbers=(((1,), (1,)), ((), ())),
        preferred_element_type=jnp.float32)                  # (C, TB)
    sT_ref[...] = jnp.tanh(s_t + bo_ref[0])


def prepare_params(params, dup=False, dtype=jnp.bfloat16):
    """One-time host-side weight preprocessing (hoisted out of the forward).

    Builds:
      * w3_cat = [w3 | w3_dup]            (only when dup)
      * block-diagonal out layer, transposed -> (C, C*H2)
      * w23 = w2 @ w3_cat  (exact fold, done in f32)
      * dtype casts for bf16 MXU inputs (keep f32 with dtype=jnp.float32)
    """
    w1, w2 = params["w1"], params["w2"]
    w3, w3d = params["w3"], params["w3_dup"]
    wo, bo = params["w_out"], params["b_out"]
    h2 = wo.shape[0]

    if dup:
        w3_cat = jnp.concatenate([w3, w3d], axis=1)                  # (E, 2*H2)
        zeros = jnp.zeros((h2, 1), wo.dtype)
        wo_cat = jnp.concatenate(
            [jnp.concatenate([wo, zeros], axis=1),
             jnp.concatenate([zeros, wo], axis=1)], axis=0)          # (2*H2, 2)
    else:
        w3_cat, wo_cat = w3, wo                                      # (E, H2), (H2, 1)

    # Exact fold (no nonlinearity between emb_layer and hidden_layer2).
    w23 = w2.astype(jnp.float32) @ w3_cat.astype(jnp.float32)        # (H, C*H2)

    return {
        "w1": w1.astype(dtype),
        "w2": w2.astype(dtype),
        "w23": w23.astype(dtype),
        "woT": wo_cat.T.astype(dtype),                               # (C, C*H2)
        "b_out": bo.reshape((1,)).astype(jnp.float32),
        "dup": dup,
    }


def edosnet_forward(x, prepared, *, batch_tile=4096):
    """x: [B, n_feature] float32. prepared: output of prepare_params().

    Returns (emb, s) when dup=False, (emb, s, s2) when dup=True.
    """
    B, F = x.shape
    w1, w2, w23, woT = (prepared["w1"], prepared["w2"],
                        prepared["w23"], prepared["woT"])
    b_out = prepared["b_out"]
    dup = prepared["dup"]
    H = w1.shape[1]
    E = w2.shape[1]
    C = woT.shape[0]
    H2C = w23.shape[1]
    cdt = w1.dtype

    # --- tile / padding selection ---
    # tile is a multiple of 128 whenever the grid has >1 step (so the
    # lane-dense (C, padded_B) score output tiles cleanly), and we force
    # >= 2 grid steps once B >= 256 so the "parallel" batch axis can shard
    # across both TensorCores on v7x.
    batch_tile = max(128, _round_up(batch_tile, 128))
    if B < 256:
        tile = _round_up(max(B, 8), 8)
        padded_B = tile
    else:
        tile = min(batch_tile, _round_up(-(-B // 2), 128))
        padded_B = _round_up(B, tile)

    x = x.astype(cdt)
    if padded_B != B:
        x = jnp.pad(x, ((0, padded_B - B), (0, 0)))
    grid = (padded_B // tile,)

    bcast = lambda shape: pl.BlockSpec(shape, lambda i: (0, 0))

    emb, s_t = pl.pallas_call(
        edosnet_kernel,
        out_shape=(
            jax.ShapeDtypeStruct((padded_B, E), jnp.float32),
            jax.ShapeDtypeStruct((C, padded_B), jnp.float32),
        ),
        grid_spec=pltpu.PrefetchScalarGridSpec(
            num_scalar_prefetch=0,
            grid=grid,
            in_specs=[
                # TODO(synk): add pipeline_mode=pl.Buffered(3) on this x spec
                # if profiling shows exposed x-tile DMA after the tile bump.
                pl.BlockSpec((tile, F), lambda i: (i, 0)),           # x tile
                bcast((F, H)),                                       # w1
                bcast((H, E)),                                       # w2
                bcast((H, H2C)),                                     # w23 (fold)
                bcast((C, H2C)),                                     # woT
                pl.BlockSpec(memory_space=pltpu.MemorySpace.SMEM),   # b_out scalar
            ],
            out_specs=[
                pl.BlockSpec((tile, E), lambda i: (i, 0)),           # emb
                pl.BlockSpec((C, tile), lambda i: (0, i)),           # s (lane-dense)
            ],
        ),
        compiler_params=pltpu.CompilerParams(
            dimension_semantics=("parallel",)),
    )(x, w1, w2, w23, woT, b_out)

    emb = emb[:B]
    if not dup:
        return emb, s_t[0, :B, None]                                  # s: (B, 1)
    return emb, s_t[0, :B, None], s_t[1, :B, None]


def init_params(key, n_feature, n_hidden, n_emb, n_hidden2):
    """Deterministic synthetic init. Weights stored as [in, out] (already
    transposed relative to torch.nn.Linear's [out, in])."""
    ks = jax.random.split(key, 6)

    def lin(k, fan_in, fan_out):
        bound = 1.0 / jnp.sqrt(fan_in)
        return jax.random.uniform(k, (fan_in, fan_out), jnp.float32,
                                  minval=-bound, maxval=bound)

    bound_o = 1.0 / float(n_hidden2) ** 0.5
    return {
        "w1":     lin(ks[0], n_feature, n_hidden),
        "w2":     lin(ks[1], n_hidden, n_emb),
        "w3":     lin(ks[2], n_emb, n_hidden2),
        "w3_dup": lin(ks[3], n_emb, n_hidden2),
        "w_out":  lin(ks[4], n_hidden2, 1),
        "b_out":  jax.random.uniform(ks[5], (1,), jnp.float32,
                                     minval=-bound_o, maxval=bound_o),
    }


def reference_forward(x, params, dup=False):
    """Plain JAX reference (mirrors the PyTorch module)."""
    h = jax.nn.leaky_relu(x @ params["w1"], NEG_SLOPE)
    emb = h @ params["w2"]
    s = jax.nn.leaky_relu(emb @ params["w3"], NEG_SLOPE)
    s = jnp.tanh(s @ params["w_out"] + params["b_out"])
    s2 = jax.nn.leaky_relu(emb @ params["w3_dup"], NEG_SLOPE)
    s2 = jnp.tanh(s2 @ params["w_out"] + params["b_out"])
    if not dup:
        return emb, s
    return emb, s, s2


if __name__ == "__main__":
    key = jax.random.PRNGKey(0)
    k_x, k_p, k_x2 = jax.random.split(key, 3)

    # small shapes: batch=16, n_feature=32, n_hidden=64, n_emb=16, n_hidden2=32
    B, n_feature, n_hidden, n_emb, n_hidden2 = 16, 32, 64, 16, 32
    x = jax.random.normal(k_x, (B, n_feature), jnp.float32)
    params = init_params(k_p, n_feature, n_hidden, n_emb, n_hidden2)
    emb_r, s_r, s2_r = reference_forward(x, params, dup=True)

    # --- f32 kernel path: tight check of the fused/folded math ---
    prep32_dup = prepare_params(params, dup=True, dtype=jnp.float32)
    emb, s, s2 = edosnet_forward(x, prep32_dup)
    jax.block_until_ready((emb, s, s2))
    assert jnp.allclose(emb, emb_r, atol=1e-4), "emb mismatch (f32, dup=True)"
    assert jnp.allclose(s, s_r, atol=1e-4), "s mismatch (f32, dup=True)"
    assert jnp.allclose(s2, s2_r, atol=1e-4), "s2 mismatch (f32, dup=True)"

    prep32_nodup = prepare_params(params, dup=False, dtype=jnp.float32)
    emb_nd, s_nd = edosnet_forward(x, prep32_nodup)
    jax.block_until_ready((emb_nd, s_nd))
    emb_r2, s_r2 = reference_forward(x, params, dup=False)
    assert jnp.allclose(emb_nd, emb_r2, atol=1e-4), "emb mismatch (f32, dup=False)"
    assert jnp.allclose(s_nd, s_r2, atol=1e-4), "s mismatch (f32, dup=False)"

    # --- default bf16 matmul path (f32 accumulation / activations) ---
    prep_bf16 = prepare_params(params, dup=True)           # dtype=bf16
    emb_b, s_b, s2_b = edosnet_forward(x, prep_bf16)
    jax.block_until_ready((emb_b, s_b, s2_b))
    assert jnp.allclose(emb_b, emb_r, atol=3e-2), "emb mismatch (bf16)"
    assert jnp.allclose(s_b, s_r, atol=3e-2), "s mismatch (bf16)"
    assert jnp.allclose(s2_b, s2_r, atol=3e-2), "s2 mismatch (bf16)"

    # --- larger, non-multiple batch: exercises padding + multi-step grid ---
    B2 = 300
    x2 = jax.random.normal(k_x2, (B2, n_feature), jnp.float32)
    emb2, s2a, s2b = edosnet_forward(x2, prep32_dup)
    jax.block_until_ready((emb2, s2a, s2b))
    emb2_r, s2a_r, s2b_r = reference_forward(x2, params, dup=True)
    assert jnp.allclose(emb2, emb2_r, atol=1e-4), "emb mismatch (B=300)"
    assert jnp.allclose(s2a, s2a_r, atol=1e-4), "s mismatch (B=300)"
    assert jnp.allclose(s2b, s2b_r, atol=1e-4), "s2 mismatch (B=300)"

    print("KERNEL_OK")
</pallas_src>

<mosaic_0001>
module attributes {stable_mosaic.version = 11 : i64} {
  func.func @edosnet_kernel(%arg0: i32, %arg1: memref<16x32xf32, #tpu.memory_space<vmem>>, %arg2: memref<32x64xf32, #tpu.memory_space<vmem>>, %arg3: memref<64x16xf32, #tpu.memory_space<vmem>>, %arg4: memref<64x64xf32, #tpu.memory_space<vmem>>, %arg5: memref<2x64xf32, #tpu.memory_space<vmem>>, %arg6: memref<1xf32, #tpu.memory_space<smem>>, %arg7: memref<16x16xf32, #tpu.memory_space<vmem>>, %arg8: memref<2x16xf32, #tpu.memory_space<vmem>>) attributes {dimension_semantics = [#tpu.dimension_semantics<parallel>], iteration_bounds = array<i64: 1>, scalar_prefetch = 0 : i64, scratch_operands = 0 : i64, tpu.core_type = #tpu.core_type<tc>, window_params = [{transform_indices = @transform_0, window_bounds = array<i64: 16, 32>}, {pipeline_mode = #tpu.pipeline_mode<synchronous>, transform_indices = @transform_1, window_bounds = array<i64: 32, 64>}, {pipeline_mode = #tpu.pipeline_mode<synchronous>, transform_indices = @transform_2, window_bounds = array<i64: 64, 16>}, {pipeline_mode = #tpu.pipeline_mode<synchronous>, transform_indices = @transform_3, window_bounds = array<i64: 64, 64>}, {pipeline_mode = #tpu.pipeline_mode<synchronous>, transform_indices = @transform_4, window_bounds = array<i64: 2, 64>}, {transform_indices = @transform_5, window_bounds = array<i64: 1>}, {transform_indices = @transform_6, window_bounds = array<i64: 16, 16>}, {transform_indices = @transform_7, window_bounds = array<i64: 2, 16>}]} {
    %c0 = arith.constant 0 : index
    %c0_0 = arith.constant 0 : index
    %0 = vector.load %arg1[%c0, %c0_0] : memref<16x32xf32, #tpu.memory_space<vmem>>, vector<16x32xf32>
    %c0_1 = arith.constant 0 : index
    %c0_2 = arith.constant 0 : index
    %1 = vector.load %arg2[%c0_1, %c0_2] : memref<32x64xf32, #tpu.memory_space<vmem>>, vector<32x64xf32>
    %cst = arith.constant dense<0.000000e+00> : vector<16x64xf32>
    %2 = tpu.matmul %0, %1, %cst {dimension_numbers = #tpu.dot_dimension_numbers<[1], [0], [0], [1], [0, 0, 1, 1], [], []>} : vector<16x32xf32>, vector<32x64xf32>, vector<16x64xf32> -> vector<16x64xf32>
    %cst_3 = arith.constant 0.000000e+00 : f32
    %3 = vector.broadcast %cst_3 : f32 to vector<16x64xf32>
    %4 = arith.cmpf ogt, %2, %3 : vector<16x64xf32>
    %cst_4 = arith.constant 0.00999999977 : f32
    %5 = vector.broadcast %cst_4 : f32 to vector<16x64xf32>
    %6 = arith.mulf %5, %2 : vector<16x64xf32>
    %7 = arith.select %4, %2, %6 : vector<16x64xi1>, vector<16x64xf32>
    %c0_5 = arith.constant 0 : index
    %c0_6 = arith.constant 0 : index
    %8 = vector.load %arg3[%c0_5, %c0_6] : memref<64x16xf32, #tpu.memory_space<vmem>>, vector<64x16xf32>
    %cst_7 = arith.constant dense<0.000000e+00> : vector<16x16xf32>
    %9 = tpu.matmul %7, %8, %cst_7 {dimension_numbers = #tpu.dot_dimension_numbers<[1], [0], [0], [1], [0, 0, 1, 1], [], []>} : vector<16x64xf32>, vector<64x16xf32>, vector<16x16xf32> -> vector<16x16xf32>
    %c0_8 = arith.constant 0 : index
    %c0_9 = arith.constant 0 : index
    %10 = vector.load %arg7[%c0_8, %c0_9] : memref<16x16xf32, #tpu.memory_space<vmem>>, vector<16x16xf32>
    tpu.vector_store %arg7[%c0_8, %c0_9], %9 {strides = array<i32>} : memref<16x16xf32, #tpu.memory_space<vmem>>, vector<16x16xf32>,
    %c0_10 = arith.constant 0 : index
    %c0_11 = arith.constant 0 : index
    %11 = vector.load %arg4[%c0_10, %c0_11] : memref<64x64xf32, #tpu.memory_space<vmem>>, vector<64x64xf32>
    %cst_12 = arith.constant dense<0.000000e+00> : vector<16x64xf32>
    %12 = tpu.matmul %7, %11, %cst_12 {dimension_numbers = #tpu.dot_dimension_numbers<[1], [0], [0], [1], [0, 0, 1, 1], [], []>} : vector<16x64xf32>, vector<64x64xf32>, vector<16x64xf32> -> vector<16x64xf32>
    %cst_13 = arith.constant 0.000000e+00 : f32
    %13 = vector.broadcast %cst_13 : f32 to vector<16x64xf32>
    %14 = arith.cmpf ogt, %12, %13 : vector<16x64xf32>
    %cst_14 = arith.constant 0.00999999977 : f32
    %15 = vector.broadcast %cst_14 : f32 to vector<16x64xf32>
    %16 = arith.mulf %15, %12 : vector<16x64xf32>
    %17 = arith.select %14, %12, %16 : vector<16x64xi1>, vector<16x64xf32>
    %c0_15 = arith.constant 0 : index
    %c0_16 = arith.constant 0 : index
    %18 = vector.load %arg5[%c0_15, %c0_16] : memref<2x64xf32, #tpu.memory_space<vmem>>, vector<2x64xf32>
    %cst_17 = arith.constant dense<0.000000e+00> : vector<2x16xf32>
    %19 = tpu.matmul %18, %17, %cst_17 {dimension_numbers = #tpu.dot_dimension_numbers<[1], [1], [0], [0], [0, 0, 1, 0], [], []>} : vector<2x64xf32>, vector<16x64xf32>, vector<2x16xf32> -> vector<2x16xf32>
    %c0_18 = arith.constant 0 : index
    %20 = memref.load %arg6[%c0_18] : memref<1xf32, #tpu.memory_space<smem>>
    %21 = vector.broadcast %20 : f32 to vector<2x16xf32>
    %22 = arith.addf %19, %21 : vector<2x16xf32>
    %23 = math.tanh %22 : vector<2x16xf32>
    %c0_19 = arith.constant 0 : index
    %c0_20 = arith.constant 0 : index
    %24 = vector.load %arg8[%c0_19, %c0_20] : memref<2x16xf32, #tpu.memory_space<vmem>>, vector<2x16xf32>
    tpu.vector_store %arg8[%c0_19, %c0_20], %23 {strides = array<i32>} : memref<2x16xf32, #tpu.memory_space<vmem>>, vector<2x16xf32>,
    return
  }
  func.func @transform_0(%arg0: i32) -> (i32, i32) {
    %c0_i32 = arith.constant 0 : i32
    %c0_i32_0 = arith.constant 0 : i32
    return %arg0, %c0_i32 : i32, i32
  }
  func.func @transform_1(%arg0: i32) -> (i32, i32) {
    %c0_i32 = arith.constant 0 : i32
    %c0_i32_0 = arith.constant 0 : i32
    %c0_i32_1 = arith.constant 0 : i32
    return %c0_i32, %c0_i32_0 : i32, i32
  }
  func.func @transform_2(%arg0: i32) -> (i32, i32) {
    %c0_i32 = arith.constant 0 : i32
    %c0_i32_0 = arith.constant 0 : i32
    %c0_i32_1 = arith.constant 0 : i32
    return %c0_i32, %c0_i32_0 : i32, i32
  }
  func.func @transform_3(%arg0: i32) -> (i32, i32) {
    %c0_i32 = arith.constant 0 : i32
    %c0_i32_0 = arith.constant 0 : i32
    %c0_i32_1 = arith.constant 0 : i32
    return %c0_i32, %c0_i32_0 : i32, i32
  }
  func.func @transform_4(%arg0: i32) -> (i32, i32) {
    %c0_i32 = arith.constant 0 : i32
    %c0_i32_0 = arith.constant 0 : i32
    %c0_i32_1 = arith.constant 0 : i32
    return %c0_i32, %c0_i32_0 : i32, i32
  }
  func.func @transform_5(%arg0: i32) -> i32 {
    %c0_i32 = arith.constant 0 : i32
    %c0_i32_0 = arith.constant 0 : i32
    return %c0_i32 : i32
  }
  func.func @transform_6(%arg0: i32) -> (i32, i32) {
    %c0_i32 = arith.constant 0 : i32
    %c0_i32_0 = arith.constant 0 : i32
    return %arg0, %c0_i32 : i32, i32
  }
  func.func @transform_7(%arg0: i32) -> (i32, i32) {
    %c0_i32 = arith.constant 0 : i32
    %c0_i32_0 = arith.constant 0 : i32
    return %c0_i32, %arg0 : i32, i32
  }
}

</mosaic_0001>

<llo_original>
// kernel: tpu_custom_call.1
$region0: #{tpu_custom_call.1}
  #allocation0 [shape = 'u32[]', space=smem, size = 0x4, offset = 0x4, fixed_abs, tag = 'smem constant byte address 0x4 - core index']
  #allocation1 [shape = 'u32[72,128]{1,0:T(1,128)}', space=vmem, size = 0x9000, scoped, tag = 'internal scratch']
  #allocation2 [shape = 'f32[1]{0:T(128)S(6)}', space=smem, size = 0x200, scoped, tag = 'scoped memory for tpu_custom_call.1']
  %s0 = inlined_call_operand.vmem [shape: f32[16,32], index: 0, kind: input, shape index: {}]
  %s1 = inlined_call_operand.hbm [shape: f32[32,64], index: 1, kind: input, shape index: {}]
  %s2 = inlined_call_operand.vmem [shape: f32[64,16], index: 2, kind: input, shape index: {}]
  %s3 = inlined_call_operand.vmem [shape: f32[64,64], index: 3, kind: input, shape index: {}]
  %s4 = inlined_call_operand.vmem [shape: f32[2,64], index: 4, kind: input, shape index: {}]
  %s5 = inlined_call_operand.<no memory space> [shape: f32[1], index: 5, kind: input, shape index: {}]
  %s6 = inlined_call_operand.hbm [shape: f32[16,16], index: 6, kind: output, shape index: {0}]
  %s7 = inlined_call_operand.hbm [shape: f32[2,16], index: 7, kind: output, shape index: {1}]
  %8 = xla_tuple %s6, %s7
  %s9 = sld [smem:[#allocation0]]
  $region46: #{tpu_custom_call.1} parent=0
    _
  %s11 = ssub.s32 1, %s9
  %s12 = scalar_select 0, %s11, %s9
  %13 = sst [smem:[#allocation2]] %s5
  $region1: #{tpu_custom_call.1} parent=0
    #allocation3 [shape = 'u8[16384]{0}', space=vmem, size = 0x4000, scoped, tag = 'input window, operand 1, single buffered']
    #allocation4 [shape = 's32[1]{0}', space=sflag, size = 0x4, scoped, tag = 'scoped memory for tpu_custom_call.1']
    #allocation5 [shape = 's32[1]{0}', space=sflag, size = 0x4, scoped, tag = 'scoped memory for tpu_custom_call.1']
    #allocation6 [shape = 'u8[8192]{0}', space=vmem, size = 0x2000, scoped, tag = 'output window, operand 0, single buffered']
    #allocation7 [shape = 'u8[1024]{0}', space=vmem, size = 0x400, scoped, tag = 'output window, operand 1, single buffered']
    #allocation8 [shape = 's32[1]{0}', space=sflag, size = 0x4, scoped, tag = 'scoped memory for tpu_custom_call.1']
    %14 = vsyncpa [#allocation4], 0
    %15 = vsyncpa [#allocation5], 0
    %16 = vsyncpa [#allocation8], 0
    // Predicated region
    $region2: #{tpu_custom_call.1} parent=1 // pred_check
      _
    $region3: #{tpu_custom_call.1} parent=1 // pred_check_branch
      %18 = sbr.rel (0) target = $region5
    $region4: #{tpu_custom_call.1} parent=1 // pred_region
      _
    $region5: #{tpu_custom_call.1} parent=1 // pred_fallthru
      _
    // Predicated region
    $region6: #{tpu_custom_call.1} parent=1 // pred_check
      _
    $region7: #{tpu_custom_call.1} parent=1 // pred_check_branch
      %20 = sbr.rel (0) target = $region9
    $region8: #{tpu_custom_call.1} parent=1 // pred_region
      %22 = vsyncadd [#allocation4], 0
      %s23 = sshll.u32 %s1, 4
      %s24 = int_to_ptr.hbm [resolvable:$true] %s23
      %s25 = sshll.u32 [#allocation3], 4
      %s26 = int_to_ptr.vmem [resolvable:$true] %s25
      %31 = dma.hbm_to_vmem [thread:$0]  %s24, 512, %s26, [#allocation4], 128, 128, 8
    $region9: #{tpu_custom_call.1} parent=1 // pred_fallthru
      _
    // Predicated region
    $region10: #{tpu_custom_call.1} parent=1 // pred_check
      _
    $region11: #{tpu_custom_call.1} parent=1 // pred_check_branch
      %33 = sbr.rel (0) target = $region13
    $region12: #{tpu_custom_call.1} parent=1 // pred_region
      _
    $region13: #{tpu_custom_call.1} parent=1 // pred_fallthru
      _
    // Predicated region
    $region14: #{tpu_custom_call.1} parent=1 // pred_check
      _
    $region15: #{tpu_custom_call.1} parent=1 // pred_check_branch
      %35 = sbr.rel (0) target = $region17
    $region16: #{tpu_custom_call.1} parent=1 // pred_region
      _
    $region17: #{tpu_custom_call.1} parent=1 // pred_fallthru
      _
    // Predicated region
    $region18: #{tpu_custom_call.1} parent=1 // pred_check
      _
    $region19: #{tpu_custom_call.1} parent=1 // pred_check_branch
      %37 = sbr.rel (0) target = $region21
    $region20: #{tpu_custom_call.1} parent=1 // pred_region
      _
    $region21: #{tpu_custom_call.1} parent=1 // pred_fallthru
      _
    // Predicated region
    $region22: #{tpu_custom_call.1} parent=1 // pred_check
      _
    $region23: #{tpu_custom_call.1} parent=1 // pred_check_branch
      %39 = sbr.rel (0) target = $region25
    $region24: #{tpu_custom_call.1} parent=1 // pred_region
      _
    $region25: #{tpu_custom_call.1} parent=1 // pred_fallthru
      _
    // Predicated region
    $region26: #{tpu_custom_call.1} parent=1 // pred_check
      _
    $region27: #{tpu_custom_call.1} parent=1 // pred_check_branch
      %41 = sbr.rel (0) target = $region29
    $region28: #{tpu_custom_call.1} parent=1 // pred_region
      %43 = dma.done [#allocation4], 512
    $region29: #{tpu_custom_call.1} parent=1 // pred_fallthru
      _
    %v44 = vld [vmem:[%s0] sm:$0xff]
    %v45 = vld [vmem:[%s0 + $0x8] sm:$0xff]
    %v46 = vld [vmem:[#allocation3] sm:$0xff]
    %v47 = vld [vmem:[#allocation3 + $0x8] sm:$0xff]
    %v48 = vld [vmem:[#allocation3 + $0x10] sm:$0xff]
    %v49 = vld [vmem:[#allocation3 + $0x18] sm:$0xff]
    %vm50 = vcmask 261120
    %v52 = vsel %vm50, %v44, 0
    %v55 = vsel %vm50, %v45, 0
    %57 = vmatpush.msra.mxu0 0.0
    %58 = vmatpush.msra.mxu0 0.0
    %59 = vmatpush.msra.mxu0 0.0
    %60 = vmatpush.msra.mxu0 0.0
    %61 = vmatpush.msra.mxu0 0.0
    %62 = vmatpush.msra.mxu0 0.0
    %63 = vmatpush.msra.mxu0 0.0
    %64 = vmatpush.msra.mxu0 0.0
    %65 = vmatpush.msra.mxu0 0.0
    %66 = vmatpush.msra.mxu0 0.0
    %67 = vmatpush.msra.mxu0 0.0
    %68 = vmatpush.msra.mxu0 0.0
    %69 = vmatpush.msra.mxu0 %v49
    %70 = vmatpush.msra.mxu0 %v48
    %71 = vmatpush.msra.mxu0 %v47
    %72 = vmatpush.msra.mxu0 %v46
    %73 = vmatmul.f32.gmra.mxu0 %v52
    %v74 = vpop.f32.mrf.mxu0
    %v75 = vadd.f32 0.0, %v74
    %76 = vmatmul.f32.gmra.mxu0 %v55
    %v77 = vpop.f32.mrf.mxu0
    %v78 = vadd.f32 0.0, %v77
    %79 = vdwg.mxu0
    %vm80 = vcmp.gt.f32.partialorder %v75, 0.0
    %vm81 = vcmp.gt.f32.partialorder %v78, 0.0
    %v82 = vmul.f32 %v75, 0.01
    %v83 = vmul.f32 %v78, 0.01
    %v84 = vsel %vm80, %v75, %v82
    %v85 = vsel %vm81, %v78, %v83
    %v86 = vld [vmem:[%s2] sm:$0xff]
    %v87 = vld [vmem:[%s2 + $0x8] sm:$0xff]
    %v88 = vld [vmem:[%s2 + $0x10] sm:$0xff]
    %v89 = vld [vmem:[%s2 + $0x18] sm:$0xff]
    %v90 = vld [vmem:[%s2 + $0x20] sm:$0xff]
    %v91 = vld [vmem:[%s2 + $0x28] sm:$0xff]
    %v92 = vld [vmem:[%s2 + $0x30] sm:$0xff]
    %v93 = vld [vmem:[%s2 + $0x38] sm:$0xff]
    %vm94 = vcmask 523264
    %v96 = vsel %vm94, %v84, 0
    %v99 = vsel %vm94, %v85, 0
    %101 = vmatpush.msra.mxu0 0.0
    %102 = vmatpush.msra.mxu0 0.0
    %103 = vmatpush.msra.mxu0 0.0
    %104 = vmatpush.msra.mxu0 0.0
    %105 = vmatpush.msra.mxu0 0.0
    %106 = vmatpush.msra.mxu0 0.0
    %107 = vmatpush.msra.mxu0 0.0
    %108 = vmatpush.msra.mxu0 0.0
    %109 = vmatpush.msra.mxu0 %v93
    %110 = vmatpush.msra.mxu0 %v92
    %111 = vmatpush.msra.mxu0 %v91
    %112 = vmatpush.msra.mxu0 %v90
    %113 = vmatpush.msra.mxu0 %v89
    %114 = vmatpush.msra.mxu0 %v88
    %115 = vmatpush.msra.mxu0 %v87
    %116 = vmatpush.msra.mxu0 %v86
    %117 = vmatmul.f32.gmra.mxu0 %v96
    %v118 = vpop.f32.mrf.mxu0
    %v119 = vadd.f32 0.0, %v118
    %120 = vmatmul.f32.gmra.mxu0 %v99
    %v121 = vpop.f32.mrf.mxu0
    %v122 = vadd.f32 0.0, %v121
    %123 = vdwg.mxu0
    %vm124 = vcmask 130048
    %125 = vst.msk [vmem:[#allocation6] sm:$0xff] %vm124, %v119
    %126 = vst.msk [vmem:[#allocation6 + $0x8] sm:$0xff] %vm124, %v122
    %v127 = vld [vmem:[%s3] sm:$0xff]
    %v128 = vld [vmem:[%s3 + $0x8] sm:$0xff]
    %v129 = vld [vmem:[%s3 + $0x10] sm:$0xff]
    %v130 = vld [vmem:[%s3 + $0x18] sm:$0xff]
    %v131 = vld [vmem:[%s3 + $0x20] sm:$0xff]
    %v132 = vld [vmem:[%s3 + $0x28] sm:$0xff]
    %v133 = vld [vmem:[%s3 + $0x30] sm:$0xff]
    %v134 = vld [vmem:[%s3 + $0x38] sm:$0xff]
    %135 = vmatpush.msra.mxu0 0.0
    %136 = vmatpush.msra.mxu0 0.0
    %137 = vmatpush.msra.mxu0 0.0
    %138 = vmatpush.msra.mxu0 0.0
    %139 = vmatpush.msra.mxu0 0.0
    %140 = vmatpush.msra.mxu0 0.0
    %141 = vmatpush.msra.mxu0 0.0
    %142 = vmatpush.msra.mxu0 0.0
    %143 = vmatpush.msra.mxu0 %v134
    %144 = vmatpush.msra.mxu0 %v133
    %145 = vmatpush.msra.mxu0 %v132
    %146 = vmatpush.msra.mxu0 %v131
    %147 = vmatpush.msra.mxu0 %v130
    %148 = vmatpush.msra.mxu0 %v129
    %149 = vmatpush.msra.mxu0 %v128
    %150 = vmatpush.msra.mxu0 %v127
    %151 = vmatmul.f32.gmra.mxu0 %v96
    %v152 = vpop.f32.mrf.mxu0
    %v153 = vadd.f32 0.0, %v152
    %154 = vmatmul.f32.gmra.mxu0 %v99
    %v155 = vpop.f32.mrf.mxu0
    %v156 = vadd.f32 0.0, %v155
    %157 = vdwg.mxu0
    %vm158 = vcmp.gt.f32.partialorder %v153, 0.0
    %vm159 = vcmp.gt.f32.partialorder %v156, 0.0
    %v160 = vmul.f32 %v153, 0.01
    %v161 = vmul.f32 %v156, 0.01
    %v162 = vsel %vm158, %v153, %v160
    %v163 = vsel %vm159, %v156, %v161
    %v164 = vld [vmem:[%s4] sm:$0x3]
    %s165 = sld [smem:[#allocation2]]
    %v166 = vstv %s165
    %v168 = vsel %vm94, %v164, 0
    %v171 = vsel %vm94, %v162, 0
    %v174 = vsel %vm94, %v163, 0
    %176 = vmatpush.xpose.msra.mxu0 0.0
    %177 = vmatpush.xpose.msra.mxu0 0.0
    %178 = vmatpush.xpose.msra.mxu0 0.0
    %179 = vmatpush.xpose.msra.mxu0 0.0
    %180 = vmatpush.xpose.msra.mxu0 0.0
    %181 = vmatpush.xpose.msra.mxu0 0.0
    %182 = vmatpush.xpose.msra.mxu0 0.0
    %183 = vmatpush.xpose.msra.mxu0 0.0
    %184 = vmatpush.xpose.msra.mxu0 0.0
    %185 = vmatpush.xpose.msra.mxu0 0.0
    %186 = vmatpush.xpose.msra.mxu0 0.0
    %187 = vmatpush.xpose.msra.mxu0 0.0
    %188 = vmatpush.xpose.msra.mxu0 0.0
    %189 = vmatpush.xpose.msra.mxu0 0.0
    %190 = vmatpush.xpose.msra.mxu0 %v174
    %191 = vmatpush.xpose.msra.mxu0 %v171
    %192 = vmatmul.f32.gmra.mxu0 %v168
    %v193 = vpop.f32.mrf.mxu0
    %v194 = vadd.f32 %v166, %v193
    %195 = vdwg.mxu0
    %v196 = vtanh.pop %v194
    %vm197 = vcmask 123904
    %198 = vst.msk [vmem:[#allocation7] sm:$0x3] %vm197, %v196
    // Predicated region
    $region30: #{tpu_custom_call.1} parent=1 // pred_check
      _
    $region31: #{tpu_custom_call.1} parent=1 // pred_check_branch
      %200 = sbr.rel (0) target = $region33
    $region32: #{tpu_custom_call.1} parent=1 // pred_region
      %202 = vsyncadd [#allocation5], 0
      %s203 = sshll.u32 [#allocation6], 4
      %s204 = int_to_ptr.vmem [resolvable:$true] %s203
      %s205 = sshll.u32 %s6, 4
      %s206 = int_to_ptr.hbm [resolvable:$true] %s205
      %211 = dma.vmem_to_hbm [thread:$0]  %s204, 256, %s206, [#allocation5], 128, 128, 8
    $region33: #{tpu_custom_call.1} parent=1 // pred_fallthru
      _
    // Predicated region
    $region34: #{tpu_custom_call.1} parent=1 // pred_check
      _
    $region35: #{tpu_custom_call.1} parent=1 // pred_check_branch
      %213 = sbr.rel (0) target = $region37
    $region36: #{tpu_custom_call.1} parent=1 // pred_region
      %215 = vsyncadd [#allocation8], 0
      %s217 = sshll.u32 [#allocation7], 4
      %s218 = int_to_ptr.vmem [resolvable:$true] %s217
      %s219 = sshll.u32 %s7, 4
      %s220 = int_to_ptr.hbm [resolvable:$true] %s219
      %222 = dma.vmem_to_hbm [thread:$0]  %s218, 32, %s220, [#allocation8]
    $region37: #{tpu_custom_call.1} parent=1 // pred_fallthru
      _
    // Predicated region
    $region38: #{tpu_custom_call.1} parent=1 // pred_check
      _
    $region39: #{tpu_custom_call.1} parent=1 // pred_check_branch
      %224 = sbr.rel (0) target = $region41
    $region40: #{tpu_custom_call.1} parent=1 // pred_region
      %226 = dma.done [#allocation5], 256
    $region41: #{tpu_custom_call.1} parent=1 // pred_fallthru
      _
    // Predicated region
    $region42: #{tpu_custom_call.1} parent=1 // pred_check
      _
    $region43: #{tpu_custom_call.1} parent=1 // pred_check_branch
      %228 = sbr.rel (0) target = $region45
    $region44: #{tpu_custom_call.1} parent=1 // pred_region
      %230 = dma.done [#allocation8], 32
    $region45: #{tpu_custom_call.1} parent=1 // pred_fallthru
      _
    %231 = vsyncpa [#allocation4], 1
    %232 = vsyncpa [#allocation5], 1
    %233 = vsyncpa [#allocation8], 1

</llo_original>
